<compile_context>
chip_gen: v5e
topology: v5e:2x2
jax: 0.10.0
libtpu: 0.0.40
codegen_flags: <defaults>
</compile_context>

<pallas_src>
import functools

import jax
import jax.numpy as jnp
from jax.experimental import pallas as pl
from jax.experimental.pallas import tpu as pltpu

_LANE = 128


def _round_up(x, m):
    return ((x + m - 1) // m) * m


def _vmem_limit_bytes():
    """~75% of physical VMEM: ~96 MiB on v5e/v6e (128 MiB), ~48 MiB on v7x (64 MiB)."""
    try:
        cap = pltpu.get_tpu_info().vmem_capacity_bytes
    except Exception:
        cap = 64 << 20  # conservative fallback (v7x physical)
    return (int(cap) * 3) // 4


def _pick_tm(n128):
    """Row tile: power-of-two multiple of 128, <=512, >=2 row tiles when possible."""
    tm = _LANE
    while tm * 2 <= min(512, n128):
        tm *= 2
    while tm > _LANE and (n128 + tm - 1) // tm < 2:  # keep both v7x TCs busy
        tm //= 2
    return tm


# ----------------------------------------------------------------------------
# Kernel 1: feature transform  XW_scaled = dinv[:, None] * (X @ W)
#   (right D^-1/2 factor folded in; grid over node-row tiles, W resident)
# ----------------------------------------------------------------------------
def _feature_kernel(x_ref, w_ref, dinv_ref, o_ref):
    xw = jnp.dot(x_ref[...], w_ref[...], preferred_element_type=jnp.float32)
    o_ref[...] = (dinv_ref[...] * xw).astype(o_ref.dtype)


def _feature_transform(x_p, w_p, dinv_col, tm, *, out_dtype, vmem_limit):
    n_pad, cin_p = x_p.shape
    cout_p = w_p.shape[1]
    grid = (n_pad // tm,)
    flops = 2 * n_pad * cin_p * cout_p
    bytes_accessed = (
        x_p.size * x_p.dtype.itemsize
        + w_p.size * w_p.dtype.itemsize            # W resident: fetched once
        + dinv_col.size * dinv_col.dtype.itemsize
        + n_pad * cout_p * jnp.dtype(out_dtype).itemsize
    )
    return pl.pallas_call(
        _feature_kernel,
        out_shape=jax.ShapeDtypeStruct((n_pad, cout_p), out_dtype),
        grid_spec=pltpu.PrefetchScalarGridSpec(
            num_scalar_prefetch=0,
            grid=grid,
            in_specs=[
                pl.BlockSpec((tm, cin_p), lambda i: (i, 0)),
                pl.BlockSpec((cin_p, cout_p), lambda i: (0, 0)),  # W resident
                pl.BlockSpec((tm, 1), lambda i: (i, 0)),          # dinv rows
            ],
            out_specs=pl.BlockSpec((tm, cout_p), lambda i: (i, 0)),
        ),
        compiler_params=pltpu.CompilerParams(
            dimension_semantics=("parallel",),
            vmem_limit_bytes=vmem_limit,
        ),
        cost_estimate=pl.CostEstimate(
            flops=flops, transcendentals=0, bytes_accessed=bytes_accessed
        ),
    )(x_p, w_p, dinv_col)


# ----------------------------------------------------------------------------
# Kernel 2: aggregation  out = dinv[:, None] * (A_hat @ XW_scaled) + b  (+ act)
#   grid = (row_tiles [parallel], source_tiles [arbitrary reduction])
#   A_hat streamed in bf16 (exact), f32 VMEM accumulator, left D^-1/2 + bias
#   (+ LeakyReLU) applied in f32 at the last reduction step.
# ----------------------------------------------------------------------------
def _agg_kernel(a_ref, xw_ref, dinv_ref, b_ref, o_ref, acc_ref, *,
                apply_leaky_relu, xw_resident, tk):
    k = pl.program_id(1)

    @pl.when(k == 0)
    def _():
        acc_ref[...] = jnp.zeros_like(acc_ref)

    if xw_resident:
        start = pl.multiple_of(k * tk, tk)
        xw = xw_ref[pl.ds(start, tk), :]
    else:
        xw = xw_ref[...]

    a = a_ref[...].astype(xw.dtype)   # bf16 no-op, or exact bf16->f32 convert
    acc_ref[...] += jnp.dot(a, xw, preferred_element_type=jnp.float32)

    @pl.when(k == pl.num_programs(1) - 1)
    def _():
        out = dinv_ref[...] * acc_ref[...] + b_ref[...]
        if apply_leaky_relu:
            # PyTorch nn.LeakyReLU default negative_slope = 0.01
            out = jnp.where(out >= 0, out, jnp.float32(0.01) * out)
        o_ref[...] = out.astype(o_ref.dtype)


def _aggregate(a_p, xw_p, dinv_col, b_p, tm, tk, *, apply_leaky_relu, out_dtype,
               vmem_limit, xw_resident):
    n_pad = a_p.shape[0]
    c_p = xw_p.shape[1]
    row_tiles = n_pad // tm
    k_tiles = n_pad // tk
    grid = (row_tiles, k_tiles)

    if xw_resident:
        xw_spec = pl.BlockSpec((n_pad, c_p), lambda i, k: (0, 0))   # DMA'd once
        xw_bytes = xw_p.size * xw_p.dtype.itemsize
    else:
        xw_spec = pl.BlockSpec((tk, c_p), lambda i, k: (k, 0))      # streamed
        xw_bytes = xw_p.size * xw_p.dtype.itemsize * row_tiles

    flops = 2 * n_pad * n_pad * c_p
    bytes_accessed = (
        a_p.size * a_p.dtype.itemsize
        + xw_bytes
        + dinv_col.size * dinv_col.dtype.itemsize
        + b_p.size * b_p.dtype.itemsize
        + n_pad * c_p * jnp.dtype(out_dtype).itemsize
    )
    kernel = functools.partial(
        _agg_kernel, apply_leaky_relu=apply_leaky_relu,
        xw_resident=xw_resident, tk=tk)
    return pl.pallas_call(
        kernel,
        out_shape=jax.ShapeDtypeStruct((n_pad, c_p), out_dtype),
        grid_spec=pltpu.PrefetchScalarGridSpec(
            num_scalar_prefetch=0,
            grid=grid,
            in_specs=[
                pl.BlockSpec((tm, tk), lambda i, k: (i, k)),        # A_hat tile (bf16)
                xw_spec,                                            # XW (resident/stream)
                pl.BlockSpec((tm, 1), lambda i, k: (i, 0)),         # dinv rows
                pl.BlockSpec((1, c_p), lambda i, k: (0, 0)),        # bias resident
            ],
            out_specs=pl.BlockSpec((tm, c_p), lambda i, k: (i, 0)),
            scratch_shapes=[pltpu.VMEM((tm, c_p), jnp.float32)],
        ),
        compiler_params=pltpu.CompilerParams(
            dimension_semantics=("parallel", "arbitrary"),
            vmem_limit_bytes=vmem_limit,
        ),
        cost_estimate=pl.CostEstimate(
            flops=flops, transcendentals=0, bytes_accessed=bytes_accessed
        ),
    )(a_p, xw_p, dinv_col, b_p)


# ----------------------------------------------------------------------------
# GCNLayer forward: conv1 -> LeakyReLU -> conv2
# ----------------------------------------------------------------------------
def gcn_layer_pallas(x, edge_index, w1, b1, w2, b2, *,
                     compute_dtype=jnp.float32, max_resident_xw_bytes=None):
    """x: (N, C_in) f32, edge_index: (2, E) int32. Returns (N, C_out) f32."""
    n, c_in = x.shape
    c_hid = w1.shape[1]
    c_out = w2.shape[1]

    # ---- tiling: lane-dense 128-padded feature dims, power-of-two node tiles ---
    n128 = _round_up(n, _LANE)
    tm = _pick_tm(n128)
    tk = tm
    while tk * 2 <= min(2048, n128):   # big reduction tiles for the A stream
        tk *= 2
    n_pad = _round_up(n, tk)           # tk is a multiple of tm
    cin_p = _round_up(c_in, _LANE)
    chid_p = _round_up(c_hid, _LANE)
    cout_p = _round_up(c_out, _LANE)

    cd = jnp.dtype(compute_dtype)
    vmem_limit = _vmem_limit_bytes()

    # ---- glue: exact A_hat (0/1 + self loops) built at padded shape in bf16 ----
    # (matches PyG GCNConv with add_self_loops=True, normalize=True; the D^-1/2
    #  factors are applied in f32 inside the kernels, so bf16 A costs no accuracy)
    src, dst = edge_index[0], edge_index[1]
    diag = jnp.arange(n, dtype=edge_index.dtype)
    a_hat = jnp.zeros((n_pad, n_pad), jnp.bfloat16)
    a_hat = a_hat.at[dst, src].add(jnp.ones(src.shape, jnp.bfloat16))
    a_hat = a_hat.at[diag, diag].add(jnp.ones((n,), jnp.bfloat16))

    # Degrees straight from edge_index (no dense N^2 pass); dinv stays f32.
    deg = jnp.zeros((n_pad,), jnp.float32).at[dst].add(1.0)
    deg = deg.at[diag].add(1.0)
    dinv = jnp.where(deg > 0, jax.lax.rsqrt(deg), 0.0)
    dinv_col = dinv[:, None]                      # (n_pad, 1) f32

    # ---- padded parameters / features -----------------------------------------
    x_p = jnp.zeros((n_pad, cin_p), cd).at[:n, :c_in].set(x.astype(cd))
    w1_p = jnp.zeros((cin_p, chid_p), cd).at[:c_in, :c_hid].set(w1.astype(cd))
    b1_p = jnp.zeros((1, chid_p), jnp.float32).at[0, :c_hid].set(b1)
    w2_p = jnp.zeros((chid_p, cout_p), cd).at[:c_hid, :c_out].set(w2.astype(cd))
    b2_p = jnp.zeros((1, cout_p), jnp.float32).at[0, :c_out].set(b2)

    def _resident(c_p):
        xw_bytes = n_pad * c_p * cd.itemsize
        budget = (vmem_limit // 6) if max_resident_xw_bytes is None \
            else max_resident_xw_bytes
        return xw_bytes <= budget

    # conv1:  dinv * (A_hat @ (dinv * (X W1))) + b1  -> LeakyReLU
    xw = _feature_transform(x_p, w1_p, dinv_col, tm, out_dtype=cd,
                            vmem_limit=vmem_limit)
    h = _aggregate(a_hat, xw, dinv_col, b1_p, tm, tk, apply_leaky_relu=True,
                   out_dtype=cd, vmem_limit=vmem_limit,
                   xw_resident=_resident(chid_p))
    # conv2:  dinv * (A_hat @ (dinv * (H W2))) + b2
    hw = _feature_transform(h, w2_p, dinv_col, tm, out_dtype=cd,
                            vmem_limit=vmem_limit)
    out = _aggregate(a_hat, hw, dinv_col, b2_p, tm, tk, apply_leaky_relu=False,
                     out_dtype=jnp.float32, vmem_limit=vmem_limit,
                     xw_resident=_resident(cout_p))

    return out[:n, :c_out]


# ----------------------------------------------------------------------------
# Pure-JAX reference (for sanity checking the kernels in-script)
# ----------------------------------------------------------------------------
def gcn_layer_ref(x, edge_index, w1, b1, w2, b2):
    n = x.shape[0]
    src, dst = edge_index[0], edge_index[1]
    a_hat = jnp.zeros((n, n), jnp.float32).at[dst, src].add(1.0) + jnp.eye(n)
    deg = jnp.sum(a_hat, axis=1)
    dinv = jnp.where(deg > 0, 1.0 / jnp.sqrt(deg), 0.0)
    a_norm = dinv[:, None] * a_hat * dinv[None, :]
    h = a_norm @ (x @ w1) + b1
    h = jnp.where(h >= 0, h, 0.01 * h)
    return a_norm @ (h @ w2) + b2


def _ring_graph(n):
    idx = jnp.arange(n, dtype=jnp.int32)
    src = jnp.concatenate([idx, (idx + 1) % n])
    dst = jnp.concatenate([(idx + 1) % n, idx])
    return jnp.stack([src, dst], axis=0)            # (2, 2n) int32


if __name__ == "__main__":
    key = jax.random.PRNGKey(0)
    kx, kw1, kw2, kx2 = jax.random.split(key, 4)

    # ---- test 1: small graph (N=64), resident-XW path, f32 and bf16 ----------
    N, C_IN, C_HID, C_OUT = 64, 16, 32, 8
    x = jax.random.normal(kx, (N, C_IN), dtype=jnp.float32)
    edge_index = _ring_graph(N)

    w1 = jax.random.normal(kw1, (C_IN, C_HID), dtype=jnp.float32) * (
        1.0 / jnp.sqrt(jnp.float32(C_IN)))
    b1 = jnp.zeros((C_HID,), jnp.float32)
    w2 = jax.random.normal(kw2, (C_HID, C_OUT), dtype=jnp.float32) * (
        1.0 / jnp.sqrt(jnp.float32(C_HID)))
    b2 = jnp.zeros((C_OUT,), jnp.float32)

    ref = jax.block_until_ready(gcn_layer_ref(x, edge_index, w1, b1, w2, b2))

    gcn_f32 = jax.jit(functools.partial(gcn_layer_pallas,
                                        compute_dtype=jnp.float32))
    out_f32 = jax.block_until_ready(gcn_f32(x, edge_index, w1, b1, w2, b2))
    assert out_f32.shape == (N, C_OUT), out_f32.shape
    assert jnp.allclose(out_f32, ref, atol=1e-3, rtol=1e-3), "f32 mismatch vs reference"

    gcn_bf16 = jax.jit(functools.partial(gcn_layer_pallas,
                                         compute_dtype=jnp.bfloat16))
    out_bf16 = jax.block_until_ready(gcn_bf16(x, edge_index, w1, b1, w2, b2))
    assert out_bf16.shape == (N, C_OUT), out_bf16.shape
    assert jnp.allclose(out_bf16, ref, atol=5e-2, rtol=5e-2), "bf16 mismatch vs reference"

    # ---- test 2: N=300 exercises padding, multi-tile grid and streamed XW ----
    N2 = 300
    x2 = jax.random.normal(kx2, (N2, C_IN), dtype=jnp.float32)
    edge_index2 = _ring_graph(N2)
    ref2 = jax.block_until_ready(gcn_layer_ref(x2, edge_index2, w1, b1, w2, b2))

    gcn_stream = jax.jit(functools.partial(gcn_layer_pallas,
                                           compute_dtype=jnp.float32,
                                           max_resident_xw_bytes=0))
    out2 = jax.block_until_ready(gcn_stream(x2, edge_index2, w1, b1, w2, b2))
    assert out2.shape == (N2, C_OUT), out2.shape
    assert jnp.allclose(out2, ref2, atol=1e-3, rtol=1e-3), "streamed-XW mismatch vs reference"

    print("KERNEL_OK")
</pallas_src>

<mosaic_0001>
module attributes {stable_mosaic.version = 11 : i64} {
  func.func @_feature_kernel(%arg0: i32, %arg1: memref<128x128xf32, #tpu.memory_space<vmem>>, %arg2: memref<128x128xf32, #tpu.memory_space<vmem>>, %arg3: memref<128x1xf32, #tpu.memory_space<vmem>>, %arg4: memref<128x128xf32, #tpu.memory_space<vmem>>) attributes {dimension_semantics = [#tpu.dimension_semantics<parallel>], iteration_bounds = array<i64: 1>, scalar_prefetch = 0 : i64, scratch_operands = 0 : i64, tpu.core_type = #tpu.core_type<tc>, window_params = [{transform_indices = @transform_0, window_bounds = array<i64: 128, 128>}, {pipeline_mode = #tpu.pipeline_mode<synchronous>, transform_indices = @transform_1, window_bounds = array<i64: 128, 128>}, {transform_indices = @transform_2, window_bounds = array<i64: 128, 1>}, {transform_indices = @transform_3, window_bounds = array<i64: 128, 128>}]} {
    %c0 = arith.constant 0 : index
    %c0_0 = arith.constant 0 : index
    %0 = vector.load %arg1[%c0, %c0_0] : memref<128x128xf32, #tpu.memory_space<vmem>>, vector<128x128xf32>
    %c0_1 = arith.constant 0 : index
    %c0_2 = arith.constant 0 : index
    %1 = vector.load %arg2[%c0_1, %c0_2] : memref<128x128xf32, #tpu.memory_space<vmem>>, vector<128x128xf32>
    %cst = arith.constant dense<0.000000e+00> : vector<128x128xf32>
    %2 = tpu.matmul %0, %1, %cst {dimension_numbers = #tpu.dot_dimension_numbers<[1], [0], [0], [1], [0, 0, 1, 1], [], []>} : vector<128x128xf32>, vector<128x128xf32>, vector<128x128xf32> -> vector<128x128xf32>
    %c0_3 = arith.constant 0 : index
    %c0_4 = arith.constant 0 : index
    %3 = vector.load %arg3[%c0_3, %c0_4] : memref<128x1xf32, #tpu.memory_space<vmem>>, vector<128x1xf32>
    %4 = vector.broadcast %3 : vector<128x1xf32> to vector<128x128xf32>
    %5 = arith.mulf %4, %2 : vector<128x128xf32>
    %c0_5 = arith.constant 0 : index
    %c0_6 = arith.constant 0 : index
    %6 = vector.load %arg4[%c0_5, %c0_6] : memref<128x128xf32, #tpu.memory_space<vmem>>, vector<128x128xf32>
    tpu.vector_store %arg4[%c0_5, %c0_6], %5 {strides = array<i32>} : memref<128x128xf32, #tpu.memory_space<vmem>>, vector<128x128xf32>,
    return
  }
  func.func @transform_0(%arg0: i32) -> (i32, i32) {
    %c0_i32 = arith.constant 0 : i32
    %c0_i32_0 = arith.constant 0 : i32
    return %arg0, %c0_i32 : i32, i32
  }
  func.func @transform_1(%arg0: i32) -> (i32, i32) {
    %c0_i32 = arith.constant 0 : i32
    %c0_i32_0 = arith.constant 0 : i32
    %c0_i32_1 = arith.constant 0 : i32
    return %c0_i32, %c0_i32_0 : i32, i32
  }
  func.func @transform_2(%arg0: i32) -> (i32, i32) {
    %c0_i32 = arith.constant 0 : i32
    %c0_i32_0 = arith.constant 0 : i32
    return %arg0, %c0_i32 : i32, i32
  }
  func.func @transform_3(%arg0: i32) -> (i32, i32) {
    %c0_i32 = arith.constant 0 : i32
    %c0_i32_0 = arith.constant 0 : i32
    return %arg0, %c0_i32 : i32, i32
  }
}

module attributes {stable_mosaic.version = 11 : i64} {
  func.func @_agg_kernel(%arg0: i32, %arg1: i32, %arg2: memref<128x128xbf16, #tpu.memory_space<vmem>>, %arg3: memref<128x128xf32, #tpu.memory_space<vmem>>, %arg4: memref<128x1xf32, #tpu.memory_space<vmem>>, %arg5: memref<1x128xf32, #tpu.memory_space<vmem>>, %arg6: memref<128x128xf32, #tpu.memory_space<vmem>>, %arg7: memref<128x128xf32, #tpu.memory_space<vmem>>) attributes {dimension_semantics = [#tpu.dimension_semantics<parallel>, #tpu.dimension_semantics<arbitrary>], iteration_bounds = array<i64: 1, 1>, scalar_prefetch = 0 : i64, scratch_operands = 1 : i64, tpu.core_type = #tpu.core_type<tc>, window_params = [{transform_indices = @transform_0, window_bounds = array<i64: 128, 128>}, {pipeline_mode = #tpu.pipeline_mode<synchronous>, transform_indices = @transform_1, window_bounds = array<i64: 128, 128>}, {transform_indices = @transform_2, window_bounds = array<i64: 128, 1>}, {pipeline_mode = #tpu.pipeline_mode<synchronous>, transform_indices = @transform_3, window_bounds = array<i64: 1, 128>}, {transform_indices = @transform_4, window_bounds = array<i64: 128, 128>}]} {
    %c0_i32 = arith.constant 0 : i32
    %0 = arith.cmpi eq, %arg1, %c0_i32 : i32
    %1 = arith.extui %0 : i1 to i32
    %c0_i32_0 = arith.constant 0 : i32
    %2 = arith.cmpi ne, %1, %c0_i32_0 : i32
    scf.if %2 {
      %cst_9 = arith.constant 0.000000e+00 : f32
      %16 = vector.broadcast %cst_9 : f32 to vector<128x128xf32>
      %c0_10 = arith.constant 0 : index
      %c0_11 = arith.constant 0 : index
      %17 = vector.load %arg7[%c0_10, %c0_11] : memref<128x128xf32, #tpu.memory_space<vmem>>, vector<128x128xf32>
      tpu.vector_store %arg7[%c0_10, %c0_11], %16 {strides = array<i32>} : memref<128x128xf32, #tpu.memory_space<vmem>>, vector<128x128xf32>,
    } else {
    }
    %c128_i32 = arith.constant 128 : i32
    %3 = arith.muli %arg1, %c128_i32 : i32
    %4 = tpu.assume_multiple %3, 128 : i32
    %5 = arith.index_cast %4 : i32 to index
    %c0 = arith.constant 0 : index
    %6 = vector.load %arg3[%5, %c0] : memref<128x128xf32, #tpu.memory_space<vmem>>, vector<128x128xf32>
    %c0_1 = arith.constant 0 : index
    %c0_2 = arith.constant 0 : index
    %7 = vector.load %arg2[%c0_1, %c0_2] : memref<128x128xbf16, #tpu.memory_space<vmem>>, vector<128x128xbf16>
    %8 = arith.extf %7 : vector<128x128xbf16> to vector<128x128xf32>
    %c0_3 = arith.constant 0 : index
    %c0_4 = arith.constant 0 : index
    %9 = vector.load %arg7[%c0_3, %c0_4] : memref<128x128xf32, #tpu.memory_space<vmem>>, vector<128x128xf32>
    %cst = arith.constant dense<0.000000e+00> : vector<128x128xf32>
    %10 = tpu.matmul %8, %6, %cst {dimension_numbers = #tpu.dot_dimension_numbers<[1], [0], [0], [1], [0, 0, 1, 1], [], []>} : vector<128x128xf32>, vector<128x128xf32>, vector<128x128xf32> -> vector<128x128xf32>
    %11 = arith.addf %9, %10 : vector<128x128xf32>
    %c0_5 = arith.constant 0 : index
    %c0_6 = arith.constant 0 : index
    %12 = vector.load %arg7[%c0_5, %c0_6] : memref<128x128xf32, #tpu.memory_space<vmem>>, vector<128x128xf32>
    tpu.vector_store %arg7[%c0_5, %c0_6], %11 {strides = array<i32>} : memref<128x128xf32, #tpu.memory_space<vmem>>, vector<128x128xf32>,
    %c0_i32_7 = arith.constant 0 : i32
    %13 = arith.cmpi eq, %arg1, %c0_i32_7 : i32
    %14 = arith.extui %13 : i1 to i32
    %c0_i32_8 = arith.constant 0 : i32
    %15 = arith.cmpi ne, %14, %c0_i32_8 : i32
    scf.if %15 {
      %c0_9 = arith.constant 0 : index
      %c0_10 = arith.constant 0 : index
      %16 = vector.load %arg4[%c0_9, %c0_10] : memref<128x1xf32, #tpu.memory_space<vmem>>, vector<128x1xf32>
      %c0_11 = arith.constant 0 : index
      %c0_12 = arith.constant 0 : index
      %17 = vector.load %arg7[%c0_11, %c0_12] : memref<128x128xf32, #tpu.memory_space<vmem>>, vector<128x128xf32>
      %18 = vector.broadcast %16 : vector<128x1xf32> to vector<128x128xf32>
      %19 = arith.mulf %18, %17 : vector<128x128xf32>
      %c0_13 = arith.constant 0 : index
      %c0_14 = arith.constant 0 : index
      %20 = vector.load %arg5[%c0_13, %c0_14] : memref<1x128xf32, #tpu.memory_space<vmem>>, vector<1x128xf32>
      %21 = vector.broadcast %20 : vector<1x128xf32> to vector<128x128xf32>
      %22 = arith.addf %19, %21 : vector<128x128xf32>
      %cst_15 = arith.constant 0.000000e+00 : f32
      %23 = vector.broadcast %cst_15 : f32 to vector<128x128xf32>
      %24 = arith.cmpf oge, %22, %23 : vector<128x128xf32>
      %cst_16 = arith.constant 0.00999999977 : f32
      %25 = vector.broadcast %cst_16 : f32 to vector<128x128xf32>
      %26 = arith.mulf %25, %22 : vector<128x128xf32>
      %27 = arith.select %24, %22, %26 : vector<128x128xi1>, vector<128x128xf32>
      %c0_17 = arith.constant 0 : index
      %c0_18 = arith.constant 0 : index
      %28 = vector.load %arg6[%c0_17, %c0_18] : memref<128x128xf32, #tpu.memory_space<vmem>>, vector<128x128xf32>
      tpu.vector_store %arg6[%c0_17, %c0_18], %27 {strides = array<i32>} : memref<128x128xf32, #tpu.memory_space<vmem>>, vector<128x128xf32>,
    } else {
    }
    return
  }
  func.func @transform_0(%arg0: i32, %arg1: i32) -> (i32, i32) {
    %c0_i32 = arith.constant 0 : i32
    return %arg0, %arg1 : i32, i32
  }
  func.func @transform_1(%arg0: i32, %arg1: i32) -> (i32, i32) {
    %c0_i32 = arith.constant 0 : i32
    %c0_i32_0 = arith.constant 0 : i32
    %c0_i32_1 = arith.constant 0 : i32
    return %c0_i32, %c0_i32_0 : i32, i32
  }
  func.func @transform_2(%arg0: i32, %arg1: i32) -> (i32, i32) {
    %c0_i32 = arith.constant 0 : i32
    %c0_i32_0 = arith.constant 0 : i32
    return %arg0, %c0_i32 : i32, i32
  }
  func.func @transform_3(%arg0: i32, %arg1: i32) -> (i32, i32) {
    %c0_i32 = arith.constant 0 : i32
    %c0_i32_0 = arith.constant 0 : i32
    %c0_i32_1 = arith.constant 0 : i32
    return %c0_i32, %c0_i32_0 : i32, i32
  }
  func.func @transform_4(%arg0: i32, %arg1: i32) -> (i32, i32) {
    %c0_i32 = arith.constant 0 : i32
    %c0_i32_0 = arith.constant 0 : i32
    return %arg0, %c0_i32 : i32, i32
  }
}

module attributes {stable_mosaic.version = 11 : i64} {
  func.func @_agg_kernel(%arg0: i32, %arg1: i32, %arg2: memref<128x128xbf16, #tpu.memory_space<vmem>>, %arg3: memref<128x128xf32, #tpu.memory_space<vmem>>, %arg4: memref<128x1xf32, #tpu.memory_space<vmem>>, %arg5: memref<1x128xf32, #tpu.memory_space<vmem>>, %arg6: memref<128x128xf32, #tpu.memory_space<vmem>>, %arg7: memref<128x128xf32, #tpu.memory_space<vmem>>) attributes {dimension_semantics = [#tpu.dimension_semantics<parallel>, #tpu.dimension_semantics<arbitrary>], iteration_bounds = array<i64: 1, 1>, scalar_prefetch = 0 : i64, scratch_operands = 1 : i64, tpu.core_type = #tpu.core_type<tc>, window_params = [{transform_indices = @transform_0, window_bounds = array<i64: 128, 128>}, {pipeline_mode = #tpu.pipeline_mode<synchronous>, transform_indices = @transform_1, window_bounds = array<i64: 128, 128>}, {transform_indices = @transform_2, window_bounds = array<i64: 128, 1>}, {pipeline_mode = #tpu.pipeline_mode<synchronous>, transform_indices = @transform_3, window_bounds = array<i64: 1, 128>}, {transform_indices = @transform_4, window_bounds = array<i64: 128, 128>}]} {
    %c0_i32 = arith.constant 0 : i32
    %0 = arith.cmpi eq, %arg1, %c0_i32 : i32
    %1 = arith.extui %0 : i1 to i32
    %c0_i32_0 = arith.constant 0 : i32
    %2 = arith.cmpi ne, %1, %c0_i32_0 : i32
    scf.if %2 {
      %cst_9 = arith.constant 0.000000e+00 : f32
      %16 = vector.broadcast %cst_9 : f32 to vector<128x128xf32>
      %c0_10 = arith.constant 0 : index
      %c0_11 = arith.constant 0 : index
      %17 = vector.load %arg7[%c0_10, %c0_11] : memref<128x128xf32, #tpu.memory_space<vmem>>, vector<128x128xf32>
      tpu.vector_store %arg7[%c0_10, %c0_11], %16 {strides = array<i32>} : memref<128x128xf32, #tpu.memory_space<vmem>>, vector<128x128xf32>,
    } else {
    }
    %c128_i32 = arith.constant 128 : i32
    %3 = arith.muli %arg1, %c128_i32 : i32
    %4 = tpu.assume_multiple %3, 128 : i32
    %5 = arith.index_cast %4 : i32 to index
    %c0 = arith.constant 0 : index
    %6 = vector.load %arg3[%5, %c0] : memref<128x128xf32, #tpu.memory_space<vmem>>, vector<128x128xf32>
    %c0_1 = arith.constant 0 : index
    %c0_2 = arith.constant 0 : index
    %7 = vector.load %arg2[%c0_1, %c0_2] : memref<128x128xbf16, #tpu.memory_space<vmem>>, vector<128x128xbf16>
    %8 = arith.extf %7 : vector<128x128xbf16> to vector<128x128xf32>
    %c0_3 = arith.constant 0 : index
    %c0_4 = arith.constant 0 : index
    %9 = vector.load %arg7[%c0_3, %c0_4] : memref<128x128xf32, #tpu.memory_space<vmem>>, vector<128x128xf32>
    %cst = arith.constant dense<0.000000e+00> : vector<128x128xf32>
    %10 = tpu.matmul %8, %6, %cst {dimension_numbers = #tpu.dot_dimension_numbers<[1], [0], [0], [1], [0, 0, 1, 1], [], []>} : vector<128x128xf32>, vector<128x128xf32>, vector<128x128xf32> -> vector<128x128xf32>
    %11 = arith.addf %9, %10 : vector<128x128xf32>
    %c0_5 = arith.constant 0 : index
    %c0_6 = arith.constant 0 : index
    %12 = vector.load %arg7[%c0_5, %c0_6] : memref<128x128xf32, #tpu.memory_space<vmem>>, vector<128x128xf32>
    tpu.vector_store %arg7[%c0_5, %c0_6], %11 {strides = array<i32>} : memref<128x128xf32, #tpu.memory_space<vmem>>, vector<128x128xf32>,
    %c0_i32_7 = arith.constant 0 : i32
    %13 = arith.cmpi eq, %arg1, %c0_i32_7 : i32
    %14 = arith.extui %13 : i1 to i32
    %c0_i32_8 = arith.constant 0 : i32
    %15 = arith.cmpi ne, %14, %c0_i32_8 : i32
    scf.if %15 {
      %c0_9 = arith.constant 0 : index
      %c0_10 = arith.constant 0 : index
      %16 = vector.load %arg4[%c0_9, %c0_10] : memref<128x1xf32, #tpu.memory_space<vmem>>, vector<128x1xf32>
      %c0_11 = arith.constant 0 : index
      %c0_12 = arith.constant 0 : index
      %17 = vector.load %arg7[%c0_11, %c0_12] : memref<128x128xf32, #tpu.memory_space<vmem>>, vector<128x128xf32>
      %18 = vector.broadcast %16 : vector<128x1xf32> to vector<128x128xf32>
      %19 = arith.mulf %18, %17 : vector<128x128xf32>
      %c0_13 = arith.constant 0 : index
      %c0_14 = arith.constant 0 : index
      %20 = vector.load %arg5[%c0_13, %c0_14] : memref<1x128xf32, #tpu.memory_space<vmem>>, vector<1x128xf32>
      %21 = vector.broadcast %20 : vector<1x128xf32> to vector<128x128xf32>
      %22 = arith.addf %19, %21 : vector<128x128xf32>
      %c0_15 = arith.constant 0 : index
      %c0_16 = arith.constant 0 : index
      %23 = vector.load %arg6[%c0_15, %c0_16] : memref<128x128xf32, #tpu.memory_space<vmem>>, vector<128x128xf32>
      tpu.vector_store %arg6[%c0_15, %c0_16], %22 {strides = array<i32>} : memref<128x128xf32, #tpu.memory_space<vmem>>, vector<128x128xf32>,
    } else {
    }
    return
  }
  func.func @transform_0(%arg0: i32, %arg1: i32) -> (i32, i32) {
    %c0_i32 = arith.constant 0 : i32
    return %arg0, %arg1 : i32, i32
  }
  func.func @transform_1(%arg0: i32, %arg1: i32) -> (i32, i32) {
    %c0_i32 = arith.constant 0 : i32
    %c0_i32_0 = arith.constant 0 : i32
    %c0_i32_1 = arith.constant 0 : i32
    return %c0_i32, %c0_i32_0 : i32, i32
  }
  func.func @transform_2(%arg0: i32, %arg1: i32) -> (i32, i32) {
    %c0_i32 = arith.constant 0 : i32
    %c0_i32_0 = arith.constant 0 : i32
    return %arg0, %c0_i32 : i32, i32
  }
  func.func @transform_3(%arg0: i32, %arg1: i32) -> (i32, i32) {
    %c0_i32 = arith.constant 0 : i32
    %c0_i32_0 = arith.constant 0 : i32
    %c0_i32_1 = arith.constant 0 : i32
    return %c0_i32, %c0_i32_0 : i32, i32
  }
  func.func @transform_4(%arg0: i32, %arg1: i32) -> (i32, i32) {
    %c0_i32 = arith.constant 0 : i32
    %c0_i32_0 = arith.constant 0 : i32
    return %arg0, %c0_i32 : i32, i32
  }
}

</mosaic_0001>

<llo_original>
// kernel: gcn_layer_pallas.4
$region0: #{gcn_layer_pallas.4}
  #allocation0 [shape = 'u32[]', space=smem, size = 0x4, offset = 0x4, fixed_abs, tag = 'smem constant byte address 0x4 - core index']
  #allocation1 [shape = 'u32[72,128]{1,0:T(1,128)}', space=vmem, size = 0x9000, scoped, tag = 'internal scratch']
  %s0 = inlined_call_operand.vmem [shape: f32[128,128], index: 0, kind: input, shape index: {}]
  %s1 = inlined_call_operand.vmem [shape: f32[128,128], index: 1, kind: input, shape index: {}]
  %s2 = inlined_call_operand.vmem [shape: f32[128,1], index: 2, kind: input, shape index: {}]
  %s3 = inlined_call_operand.vmem [shape: f32[128,128], index: 3, kind: output, shape index: {}]
  %s4 = sld [smem:[#allocation0]]
  $region22: #{gcn_layer_pallas.4} parent=0
    _
  %s6 = ssub.s32 1, %s4
  %s7 = scalar_select 0, %s6, %s4
  // Predicated region
  $region2: #{gcn_layer_pallas.4} parent=0 // pred_check
    _
  $region3: #{gcn_layer_pallas.4} parent=0 // pred_check_branch
    %9 = sbr.rel (0) target = $region5
  $region4: #{gcn_layer_pallas.4} parent=0 // pred_region
    _
  $region5: #{gcn_layer_pallas.4} parent=0 // pred_fallthru
    _
  // Predicated region
  $region6: #{gcn_layer_pallas.4} parent=0 // pred_check
    _
  $region7: #{gcn_layer_pallas.4} parent=0 // pred_check_branch
    %11 = sbr.rel (0) target = $region9
  $region8: #{gcn_layer_pallas.4} parent=0 // pred_region
    _
  $region9: #{gcn_layer_pallas.4} parent=0 // pred_fallthru
    _
  // Predicated region
  $region10: #{gcn_layer_pallas.4} parent=0 // pred_check
    _
  $region11: #{gcn_layer_pallas.4} parent=0 // pred_check_branch
    %13 = sbr.rel (0) target = $region13
  $region12: #{gcn_layer_pallas.4} parent=0 // pred_region
    _
  $region13: #{gcn_layer_pallas.4} parent=0 // pred_fallthru
    _
  %v14 = vld [vmem:[%s0] sm:$0xff]
  %v15 = vld [vmem:[%s0 + $0x8] sm:$0xff]
  %v16 = vld [vmem:[%s0 + $0x10] sm:$0xff]
  %v17 = vld [vmem:[%s0 + $0x18] sm:$0xff]
  %v18 = vld [vmem:[%s0 + $0x20] sm:$0xff]
  %v19 = vld [vmem:[%s0 + $0x28] sm:$0xff]
  %v20 = vld [vmem:[%s0 + $0x30] sm:$0xff]
  %v21 = vld [vmem:[%s0 + $0x38] sm:$0xff]
  %v22 = vld [vmem:[%s0 + $0x40] sm:$0xff]
  %v23 = vld [vmem:[%s0 + $0x48] sm:$0xff]
  %v24 = vld [vmem:[%s0 + $0x50] sm:$0xff]
  %v25 = vld [vmem:[%s0 + $0x58] sm:$0xff]
  %v26 = vld [vmem:[%s0 + $0x60] sm:$0xff]
  %v27 = vld [vmem:[%s0 + $0x68] sm:$0xff]
  %v28 = vld [vmem:[%s0 + $0x70] sm:$0xff]
  %v29 = vld [vmem:[%s0 + $0x78] sm:$0xff]
  %v30 = vld [vmem:[%s1] sm:$0xff]
  %v31 = vld [vmem:[%s1 + $0x8] sm:$0xff]
  %v32 = vld [vmem:[%s1 + $0x10] sm:$0xff]
  %v33 = vld [vmem:[%s1 + $0x18] sm:$0xff]
  %v34 = vld [vmem:[%s1 + $0x20] sm:$0xff]
  %v35 = vld [vmem:[%s1 + $0x28] sm:$0xff]
  %v36 = vld [vmem:[%s1 + $0x30] sm:$0xff]
  %v37 = vld [vmem:[%s1 + $0x38] sm:$0xff]
  %v38 = vld [vmem:[%s1 + $0x40] sm:$0xff]
  %v39 = vld [vmem:[%s1 + $0x48] sm:$0xff]
  %v40 = vld [vmem:[%s1 + $0x50] sm:$0xff]
  %v41 = vld [vmem:[%s1 + $0x58] sm:$0xff]
  %v42 = vld [vmem:[%s1 + $0x60] sm:$0xff]
  %v43 = vld [vmem:[%s1 + $0x68] sm:$0xff]
  %v44 = vld [vmem:[%s1 + $0x70] sm:$0xff]
  %v45 = vld [vmem:[%s1 + $0x78] sm:$0xff]
  %46 = vmatpush.msra.mxu0 %v45
  %47 = vmatpush.msra.mxu0 %v44
  %48 = vmatpush.msra.mxu0 %v43
  %49 = vmatpush.msra.mxu0 %v42
  %50 = vmatpush.msra.mxu0 %v41
  %51 = vmatpush.msra.mxu0 %v40
  %52 = vmatpush.msra.mxu0 %v39
  %53 = vmatpush.msra.mxu0 %v38
  %54 = vmatpush.msra.mxu0 %v37
  %55 = vmatpush.msra.mxu0 %v36
  %56 = vmatpush.msra.mxu0 %v35
  %57 = vmatpush.msra.mxu0 %v34
  %58 = vmatpush.msra.mxu0 %v33
  %59 = vmatpush.msra.mxu0 %v32
  %60 = vmatpush.msra.mxu0 %v31
  %61 = vmatpush.msra.mxu0 %v30
  %62 = vmatmul.f32.gmra.mxu0 %v14
  %v63 = vpop.f32.mrf.mxu0
  %v64 = vadd.f32 0.0, %v63
  %65 = vmatmul.f32.gmra.mxu0 %v15
  %v66 = vpop.f32.mrf.mxu0
  %v67 = vadd.f32 0.0, %v66
  %68 = vmatmul.f32.gmra.mxu0 %v16
  %v69 = vpop.f32.mrf.mxu0
  %v70 = vadd.f32 0.0, %v69
  %71 = vmatmul.f32.gmra.mxu0 %v17
  %v72 = vpop.f32.mrf.mxu0
  %v73 = vadd.f32 0.0, %v72
  %74 = vmatmul.f32.gmra.mxu0 %v18
  %v75 = vpop.f32.mrf.mxu0
  %v76 = vadd.f32 0.0, %v75
  %77 = vmatmul.f32.gmra.mxu0 %v19
  %v78 = vpop.f32.mrf.mxu0
  %v79 = vadd.f32 0.0, %v78
  %80 = vmatmul.f32.gmra.mxu0 %v20
  %v81 = vpop.f32.mrf.mxu0
  %v82 = vadd.f32 0.0, %v81
  %83 = vmatmul.f32.gmra.mxu0 %v21
  %v84 = vpop.f32.mrf.mxu0
  %v85 = vadd.f32 0.0, %v84
  %86 = vmatmul.f32.gmra.mxu0 %v22
  %v87 = vpop.f32.mrf.mxu0
  %v88 = vadd.f32 0.0, %v87
  %89 = vmatmul.f32.gmra.mxu0 %v23
  %v90 = vpop.f32.mrf.mxu0
  %v91 = vadd.f32 0.0, %v90
  %92 = vmatmul.f32.gmra.mxu0 %v24
  %v93 = vpop.f32.mrf.mxu0
  %v94 = vadd.f32 0.0, %v93
  %95 = vmatmul.f32.gmra.mxu0 %v25
  %v96 = vpop.f32.mrf.mxu0
  %v97 = vadd.f32 0.0, %v96
  %98 = vmatmul.f32.gmra.mxu0 %v26
  %v99 = vpop.f32.mrf.mxu0
  %v100 = vadd.f32 0.0, %v99
  %101 = vmatmul.f32.gmra.mxu0 %v27
  %v102 = vpop.f32.mrf.mxu0
  %v103 = vadd.f32 0.0, %v102
  %104 = vmatmul.f32.gmra.mxu0 %v28
  %v105 = vpop.f32.mrf.mxu0
  %v106 = vadd.f32 0.0, %v105
  %107 = vmatmul.f32.gmra.mxu0 %v29
  %v108 = vpop.f32.mrf.mxu0
  %v109 = vadd.f32 0.0, %v108
  %110 = vdwg.mxu0
  %v111 = vld [vmem:[%s2] sm:$0xff]
  %v112 = vld [vmem:[%s2 + $0x8] sm:$0xff]
  %v113 = vld [vmem:[%s2 + $0x10] sm:$0xff]
  %v114 = vld [vmem:[%s2 + $0x18] sm:$0xff]
  %v115 = vld [vmem:[%s2 + $0x20] sm:$0xff]
  %v116 = vld [vmem:[%s2 + $0x28] sm:$0xff]
  %v117 = vld [vmem:[%s2 + $0x30] sm:$0xff]
  %v118 = vld [vmem:[%s2 + $0x38] sm:$0xff]
  %v119 = vld [vmem:[%s2 + $0x40] sm:$0xff]
  %v120 = vld [vmem:[%s2 + $0x48] sm:$0xff]
  %v121 = vld [vmem:[%s2 + $0x50] sm:$0xff]
  %v122 = vld [vmem:[%s2 + $0x58] sm:$0xff]
  %v123 = vld [vmem:[%s2 + $0x60] sm:$0xff]
  %v124 = vld [vmem:[%s2 + $0x68] sm:$0xff]
  %v125 = vld [vmem:[%s2 + $0x70] sm:$0xff]
  %v126 = vld [vmem:[%s2 + $0x78] sm:$0xff]
  %128 = vset.pattern.permute.xlu0 0
  %129 = vperm.xlu0 %128, %v111
  %v130 = vpop.permute.xlu0 %129
  %133 = vset.pattern.permute.xlu0 0
  %134 = vperm.xlu0 %133, %v112
  %v135 = vpop.permute.xlu0 %134
  %138 = vset.pattern.permute.xlu0 0
  %139 = vperm.xlu0 %138, %v113
  %v140 = vpop.permute.xlu0 %139
  %143 = vset.pattern.permute.xlu0 0
  %144 = vperm.xlu0 %143, %v114
  %v145 = vpop.permute.xlu0 %144
  %148 = vset.pattern.permute.xlu0 0
  %149 = vperm.xlu0 %148, %v115
  %v150 = vpop.permute.xlu0 %149
  %153 = vset.pattern.permute.xlu0 0
  %154 = vperm.xlu0 %153, %v116
  %v155 = vpop.permute.xlu0 %154
  %158 = vset.pattern.permute.xlu0 0
  %159 = vperm.xlu0 %158, %v117
  %v160 = vpop.permute.xlu0 %159
  %163 = vset.pattern.permute.xlu0 0
  %164 = vperm.xlu0 %163, %v118
  %v165 = vpop.permute.xlu0 %164
  %168 = vset.pattern.permute.xlu0 0
  %169 = vperm.xlu0 %168, %v119
  %v170 = vpop.permute.xlu0 %169
  %173 = vset.pattern.permute.xlu0 0
  %174 = vperm.xlu0 %173, %v120
  %v175 = vpop.permute.xlu0 %174
  %178 = vset.pattern.permute.xlu0 0
  %179 = vperm.xlu0 %178, %v121
  %v180 = vpop.permute.xlu0 %179
  %183 = vset.pattern.permute.xlu0 0
  %184 = vperm.xlu0 %183, %v122
  %v185 = vpop.permute.xlu0 %184
  %188 = vset.pattern.permute.xlu0 0
  %189 = vperm.xlu0 %188, %v123
  %v190 = vpop.permute.xlu0 %189
  %193 = vset.pattern.permute.xlu0 0
  %194 = vperm.xlu0 %193, %v124
  %v195 = vpop.permute.xlu0 %194
  %198 = vset.pattern.permute.xlu0 0
  %199 = vperm.xlu0 %198, %v125
  %v200 = vpop.permute.xlu0 %199
  %203 = vset.pattern.permute.xlu0 0
  %204 = vperm.xlu0 %203, %v126
  %v205 = vpop.permute.xlu0 %204
  %v207 = vmul.f32 %v130, %v64
  %v208 = vmul.f32 %v135, %v67
  %v209 = vmul.f32 %v140, %v70
  %v210 = vmul.f32 %v145, %v73
  %v211 = vmul.f32 %v150, %v76
  %v212 = vmul.f32 %v155, %v79
  %v213 = vmul.f32 %v160, %v82
  %v214 = vmul.f32 %v165, %v85
  %v215 = vmul.f32 %v170, %v88
  %v216 = vmul.f32 %v175, %v91
  %v217 = vmul.f32 %v180, %v94
  %v218 = vmul.f32 %v185, %v97
  %v219 = vmul.f32 %v190, %v100
  %v220 = vmul.f32 %v195, %v103
  %v221 = vmul.f32 %v200, %v106
  %v222 = vmul.f32 %v205, %v109
  %223 = vst [vmem:[%s3] sm:$0xff] %v207
  %224 = vst [vmem:[%s3 + $0x8] sm:$0xff] %v208
  %225 = vst [vmem:[%s3 + $0x10] sm:$0xff] %v209
  %226 = vst [vmem:[%s3 + $0x18] sm:$0xff] %v210
  %227 = vst [vmem:[%s3 + $0x20] sm:$0xff] %v211
  %228 = vst [vmem:[%s3 + $0x28] sm:$0xff] %v212
  %229 = vst [vmem:[%s3 + $0x30] sm:$0xff] %v213
  %230 = vst [vmem:[%s3 + $0x38] sm:$0xff] %v214
  %231 = vst [vmem:[%s3 + $0x40] sm:$0xff] %v215
  %232 = vst [vmem:[%s3 + $0x48] sm:$0xff] %v216
  %233 = vst [vmem:[%s3 + $0x50] sm:$0xff] %v217
  %234 = vst [vmem:[%s3 + $0x58] sm:$0xff] %v218
  %235 = vst [vmem:[%s3 + $0x60] sm:$0xff] %v219
  %236 = vst [vmem:[%s3 + $0x68] sm:$0xff] %v220
  %237 = vst [vmem:[%s3 + $0x70] sm:$0xff] %v221
  %238 = vst [vmem:[%s3 + $0x78] sm:$0xff] %v222
  // Predicated region
  $region14: #{gcn_layer_pallas.4} parent=0 // pred_check
    _
  $region15: #{gcn_layer_pallas.4} parent=0 // pred_check_branch
    %240 = sbr.rel (0) target = $region17
  $region16: #{gcn_layer_pallas.4} parent=0 // pred_region
    _
  $region17: #{gcn_layer_pallas.4} parent=0 // pred_fallthru
    _
  // Predicated region
  $region18: #{gcn_layer_pallas.4} parent=0 // pred_check
    _
  $region19: #{gcn_layer_pallas.4} parent=0 // pred_check_branch
    %242 = sbr.rel (0) target = $region21
  $region20: #{gcn_layer_pallas.4} parent=0 // pred_region
    _
  $region21: #{gcn_layer_pallas.4} parent=0 // pred_fallthru
    _

// kernel: gcn_layer_pallas.5
$region0: #{gcn_layer_pallas.5}
  #allocation0 [shape = 'u32[]', space=smem, size = 0x4, offset = 0x4, fixed_abs, tag = 'smem constant byte address 0x4 - core index']
  #allocation1 [shape = 'u32[72,128]{1,0:T(1,128)}', space=vmem, size = 0x9000, scoped, tag = 'internal scratch']
  #allocation2 [shape = 'f32[128,128]{1,0:T(8,128)}', space=vmem, size = 0x10000, scoped, tag = 'scratch operand']
  %s0 = inlined_call_operand.vmem [shape: bf16[128,128], index: 0, kind: input, shape index: {}]
  %s1 = inlined_call_operand.vmem [shape: f32[128,128], index: 1, kind: input, shape index: {}]
  %s2 = inlined_call_operand.vmem [shape: f32[128,1], index: 2, kind: input, shape index: {}]
  %s3 = inlined_call_operand.vmem [shape: f32[1,128], index: 3, kind: input, shape index: {}]
  %s4 = inlined_call_operand.vmem [shape: f32[128,128], index: 4, kind: output, shape index: {}]
  %s5 = sld [smem:[#allocation0]]
  $region34: #{gcn_layer_pallas.5} parent=0
    _
  %s7 = ssub.s32 1, %s5
  %s8 = scalar_select 0, %s7, %s5
  // Predicated region
  $region2: #{gcn_layer_pallas.5} parent=0 // pred_check
    _
  $region3: #{gcn_layer_pallas.5} parent=0 // pred_check_branch
    %10 = sbr.rel (0) target = $region5
  $region4: #{gcn_layer_pallas.5} parent=0 // pred_region
    _
  $region5: #{gcn_layer_pallas.5} parent=0 // pred_fallthru
    _
  // Predicated region
  $region6: #{gcn_layer_pallas.5} parent=0 // pred_check
    _
  $region7: #{gcn_layer_pallas.5} parent=0 // pred_check_branch
    %12 = sbr.rel (0) target = $region9
  $region8: #{gcn_layer_pallas.5} parent=0 // pred_region
    _
  $region9: #{gcn_layer_pallas.5} parent=0 // pred_fallthru
    _
  // Predicated region
  $region10: #{gcn_layer_pallas.5} parent=0 // pred_check
    _
  $region11: #{gcn_layer_pallas.5} parent=0 // pred_check_branch
    %14 = sbr.rel (0) target = $region13
  $region12: #{gcn_layer_pallas.5} parent=0 // pred_region
    _
  $region13: #{gcn_layer_pallas.5} parent=0 // pred_fallthru
    _
  // Predicated region
  $region14: #{gcn_layer_pallas.5} parent=0 // pred_check
    _
  $region15: #{gcn_layer_pallas.5} parent=0 // pred_check_branch
    %16 = sbr.rel (0) target = $region17
  $region16: #{gcn_layer_pallas.5} parent=0 // pred_region
    _
  $region17: #{gcn_layer_pallas.5} parent=0 // pred_fallthru
    _
  %p17 = scmp.eq.s32.totalorder 0, 0
  // Predicated region
  $region18: #{gcn_layer_pallas.5} parent=0 // pred_check
    %p18 = pneg %p17
  $region19: #{gcn_layer_pallas.5} parent=0 // pred_check_branch
    %20 = sbr.rel (%p18) target = $region21
  $region20: #{gcn_layer_pallas.5} parent=0 // pred_region
    %21 = vst [vmem:[#allocation2] sm:$0xff] 0.0
    %22 = vst [vmem:[#allocation2 + $0x8] sm:$0xff] 0.0
    %23 = vst [vmem:[#allocation2 + $0x10] sm:$0xff] 0.0
    %24 = vst [vmem:[#allocation2 + $0x18] sm:$0xff] 0.0
    %25 = vst [vmem:[#allocation2 + $0x20] sm:$0xff] 0.0
    %26 = vst [vmem:[#allocation2 + $0x28] sm:$0xff] 0.0
    %27 = vst [vmem:[#allocation2 + $0x30] sm:$0xff] 0.0
    %28 = vst [vmem:[#allocation2 + $0x38] sm:$0xff] 0.0
    %29 = vst [vmem:[#allocation2 + $0x40] sm:$0xff] 0.0
    %30 = vst [vmem:[#allocation2 + $0x48] sm:$0xff] 0.0
    %31 = vst [vmem:[#allocation2 + $0x50] sm:$0xff] 0.0
    %32 = vst [vmem:[#allocation2 + $0x58] sm:$0xff] 0.0
    %33 = vst [vmem:[#allocation2 + $0x60] sm:$0xff] 0.0
    %34 = vst [vmem:[#allocation2 + $0x68] sm:$0xff] 0.0
    %35 = vst [vmem:[#allocation2 + $0x70] sm:$0xff] 0.0
    %36 = vst [vmem:[#allocation2 + $0x78] sm:$0xff] 0.0
  $region21: #{gcn_layer_pallas.5} parent=0 // pred_fallthru
    _
  %s37 = smul.u32 0, 128
  %s38 = scalar_lea.vmem %s1, %s37
  %v39 = vld [vmem:[%s38] sm:$0xff]
  %v40 = vld [vmem:[%s38 + $0x8] sm:$0xff]
  %v41 = vld [vmem:[%s38 + $0x10] sm:$0xff]
  %v42 = vld [vmem:[%s38 + $0x18] sm:$0xff]
  %v43 = vld [vmem:[%s38 + $0x20] sm:$0xff]
  %v44 = vld [vmem:[%s38 + $0x28] sm:$0xff]
  %v45 = vld [vmem:[%s38 + $0x30] sm:$0xff]
  %v46 = vld [vmem:[%s38 + $0x38] sm:$0xff]
  %v47 = vld [vmem:[%s38 + $0x40] sm:$0xff]
  %v48 = vld [vmem:[%s38 + $0x48] sm:$0xff]
  %v49 = vld [vmem:[%s38 + $0x50] sm:$0xff]
  %v50 = vld [vmem:[%s38 + $0x58] sm:$0xff]
  %v51 = vld [vmem:[%s38 + $0x60] sm:$0xff]
  %v52 = vld [vmem:[%s38 + $0x68] sm:$0xff]
  %v53 = vld [vmem:[%s38 + $0x70] sm:$0xff]
  %v54 = vld [vmem:[%s38 + $0x78] sm:$0xff]
  %v55 = vld [vmem:[%s0] sm:$0xf]
  %v56 = vld [vmem:[%s0 + $0x4] sm:$0xf]
  %v57 = vld [vmem:[%s0 + $0x8] sm:$0xf]
  %v58 = vld [vmem:[%s0 + $0xc] sm:$0xf]
  %v59 = vld [vmem:[%s0 + $0x10] sm:$0xf]
  %v60 = vld [vmem:[%s0 + $0x14] sm:$0xf]
  %v61 = vld [vmem:[%s0 + $0x18] sm:$0xf]
  %v62 = vld [vmem:[%s0 + $0x1c] sm:$0xf]
  %v63 = vld [vmem:[%s0 + $0x20] sm:$0xf]
  %v64 = vld [vmem:[%s0 + $0x24] sm:$0xf]
  %v65 = vld [vmem:[%s0 + $0x28] sm:$0xf]
  %v66 = vld [vmem:[%s0 + $0x2c] sm:$0xf]
  %v67 = vld [vmem:[%s0 + $0x30] sm:$0xf]
  %v68 = vld [vmem:[%s0 + $0x34] sm:$0xf]
  %v69 = vld [vmem:[%s0 + $0x38] sm:$0xf]
  %v70 = vld [vmem:[%s0 + $0x3c] sm:$0xf]
  %v71 = vunpack.c.l.bf16 %v55
  %v72 = vunpack.c.l.bf16 %v56
  %v73 = vunpack.c.l.bf16 %v57
  %v74 = vunpack.c.l.bf16 %v58
  %v75 = vunpack.c.l.bf16 %v59
  %v76 = vunpack.c.l.bf16 %v60
  %v77 = vunpack.c.l.bf16 %v61
  %v78 = vunpack.c.l.bf16 %v62
  %v79 = vunpack.c.l.bf16 %v63
  %v80 = vunpack.c.l.bf16 %v64
  %v81 = vunpack.c.l.bf16 %v65
  %v82 = vunpack.c.l.bf16 %v66
  %v83 = vunpack.c.l.bf16 %v67
  %v84 = vunpack.c.l.bf16 %v68
  %v85 = vunpack.c.l.bf16 %v69
  %v86 = vunpack.c.l.bf16 %v70
  %v87 = vld [vmem:[#allocation2] sm:$0xff]
  %v88 = vld [vmem:[#allocation2 + $0x8] sm:$0xff]
  %v89 = vld [vmem:[#allocation2 + $0x10] sm:$0xff]
  %v90 = vld [vmem:[#allocation2 + $0x18] sm:$0xff]
  %v91 = vld [vmem:[#allocation2 + $0x20] sm:$0xff]
  %v92 = vld [vmem:[#allocation2 + $0x28] sm:$0xff]
  %v93 = vld [vmem:[#allocation2 + $0x30] sm:$0xff]
  %v94 = vld [vmem:[#allocation2 + $0x38] sm:$0xff]
  %v95 = vld [vmem:[#allocation2 + $0x40] sm:$0xff]
  %v96 = vld [vmem:[#allocation2 + $0x48] sm:$0xff]
  %v97 = vld [vmem:[#allocation2 + $0x50] sm:$0xff]
  %v98 = vld [vmem:[#allocation2 + $0x58] sm:$0xff]
  %v99 = vld [vmem:[#allocation2 + $0x60] sm:$0xff]
  %v100 = vld [vmem:[#allocation2 + $0x68] sm:$0xff]
  %v101 = vld [vmem:[#allocation2 + $0x70] sm:$0xff]
  %v102 = vld [vmem:[#allocation2 + $0x78] sm:$0xff]
  %103 = vmatpush.msra.mxu0 %v54
  %104 = vmatpush.msra.mxu0 %v53
  %105 = vmatpush.msra.mxu0 %v52
  %106 = vmatpush.msra.mxu0 %v51
  %107 = vmatpush.msra.mxu0 %v50
  %108 = vmatpush.msra.mxu0 %v49
  %109 = vmatpush.msra.mxu0 %v48
  %110 = vmatpush.msra.mxu0 %v47
  %111 = vmatpush.msra.mxu0 %v46
  %112 = vmatpush.msra.mxu0 %v45
  %113 = vmatpush.msra.mxu0 %v44
  %114 = vmatpush.msra.mxu0 %v43
  %115 = vmatpush.msra.mxu0 %v42
  %116 = vmatpush.msra.mxu0 %v41
  %117 = vmatpush.msra.mxu0 %v40
  %118 = vmatpush.msra.mxu0 %v39
  %119 = vmatmul.f32.gmra.mxu0 %v71
  %v120 = vpop.f32.mrf.mxu0
  %v121 = vadd.f32 0.0, %v120
  %122 = vmatmul.f32.gmra.mxu0 %v72
  %v123 = vpop.f32.mrf.mxu0
  %v124 = vadd.f32 0.0, %v123
  %125 = vmatmul.f32.gmra.mxu0 %v73
  %v126 = vpop.f32.mrf.mxu0
  %v127 = vadd.f32 0.0, %v126
  %128 = vmatmul.f32.gmra.mxu0 %v74
  %v129 = vpop.f32.mrf.mxu0
  %v130 = vadd.f32 0.0, %v129
  %131 = vmatmul.f32.gmra.mxu0 %v75
  %v132 = vpop.f32.mrf.mxu0
  %v133 = vadd.f32 0.0, %v132
  %134 = vmatmul.f32.gmra.mxu0 %v76
  %v135 = vpop.f32.mrf.mxu0
  %v136 = vadd.f32 0.0, %v135
  %137 = vmatmul.f32.gmra.mxu0 %v77
  %v138 = vpop.f32.mrf.mxu0
  %v139 = vadd.f32 0.0, %v138
  %140 = vmatmul.f32.gmra.mxu0 %v78
  %v141 = vpop.f32.mrf.mxu0
  %v142 = vadd.f32 0.0, %v141
  %143 = vmatmul.f32.gmra.mxu0 %v79
  %v144 = vpop.f32.mrf.mxu0
  %v145 = vadd.f32 0.0, %v144
  %146 = vmatmul.f32.gmra.mxu0 %v80
  %v147 = vpop.f32.mrf.mxu0
  %v148 = vadd.f32 0.0, %v147
  %149 = vmatmul.f32.gmra.mxu0 %v81
  %v150 = vpop.f32.mrf.mxu0
  %v151 = vadd.f32 0.0, %v150
  %152 = vmatmul.f32.gmra.mxu0 %v82
  %v153 = vpop.f32.mrf.mxu0
  %v154 = vadd.f32 0.0, %v153
  %155 = vmatmul.f32.gmra.mxu0 %v83
  %v156 = vpop.f32.mrf.mxu0
  %v157 = vadd.f32 0.0, %v156
  %158 = vmatmul.f32.gmra.mxu0 %v84
  %v159 = vpop.f32.mrf.mxu0
  %v160 = vadd.f32 0.0, %v159
  %161 = vmatmul.f32.gmra.mxu0 %v85
  %v162 = vpop.f32.mrf.mxu0
  %v163 = vadd.f32 0.0, %v162
  %164 = vmatmul.f32.gmra.mxu0 %v86
  %v165 = vpop.f32.mrf.mxu0
  %v166 = vadd.f32 0.0, %v165
  %167 = vdwg.mxu0
  %v168 = vadd.f32 %v87, %v121
  %v169 = vadd.f32 %v88, %v124
  %v170 = vadd.f32 %v89, %v127
  %v171 = vadd.f32 %v90, %v130
  %v172 = vadd.f32 %v91, %v133
  %v173 = vadd.f32 %v92, %v136
  %v174 = vadd.f32 %v93, %v139
  %v175 = vadd.f32 %v94, %v142
  %v176 = vadd.f32 %v95, %v145
  %v177 = vadd.f32 %v96, %v148
  %v178 = vadd.f32 %v97, %v151
  %v179 = vadd.f32 %v98, %v154
  %v180 = vadd.f32 %v99, %v157
  %v181 = vadd.f32 %v100, %v160
  %v182 = vadd.f32 %v101, %v163
  %v183 = vadd.f32 %v102, %v166
  %184 = vst [vmem:[#allocation2] sm:$0xff] %v168
  %185 = vst [vmem:[#allocation2 + $0x8] sm:$0xff] %v169
  %186 = vst [vmem:[#allocation2 + $0x10] sm:$0xff] %v170
  %187 = vst [vmem:[#allocation2 + $0x18] sm:$0xff] %v171
  %188 = vst [vmem:[#allocation2 + $0x20] sm:$0xff] %v172
  %189 = vst [vmem:[#allocation2 + $0x28] sm:$0xff] %v173
  %190 = vst [vmem:[#allocation2 + $0x30] sm:$0xff] %v174
  %191 = vst [vmem:[#allocation2 + $0x38] sm:$0xff] %v175
  %192 = vst [vmem:[#allocation2 + $0x40] sm:$0xff] %v176
  %193 = vst [vmem:[#allocation2 + $0x48] sm:$0xff] %v177
  %194 = vst [vmem:[#allocation2 + $0x50] sm:$0xff] %v178
  %195 = vst [vmem:[#allocation2 + $0x58] sm:$0xff] %v179
  %196 = vst [vmem:[#allocation2 + $0x60] sm:$0xff] %v180
  %197 = vst [vmem:[#allocation2 + $0x68] sm:$0xff] %v181
  %198 = vst [vmem:[#allocation2 + $0x70] sm:$0xff] %v182
  %199 = vst [vmem:[#allocation2 + $0x78] sm:$0xff] %v183
  // Predicated region
  $region22: #{gcn_layer_pallas.5} parent=0 // pred_check
    %p200 = pneg %p17
  $region23: #{gcn_layer_pallas.5} parent=0 // pred_check_branch
    %202 = sbr.rel (%p200) target = $region25
  $region24: #{gcn_layer_pallas.5} parent=0 // pred_region
    %v203 = vld [vmem:[%s2] sm:$0xff]
    %v204 = vld [vmem:[%s2 + $0x8] sm:$0xff]
    %v205 = vld [vmem:[%s2 + $0x10] sm:$0xff]
    %v206 = vld [vmem:[%s2 + $0x18] sm:$0xff]
    %v207 = vld [vmem:[%s2 + $0x20] sm:$0xff]
    %v208 = vld [vmem:[%s2 + $0x28] sm:$0xff]
    %v209 = vld [vmem:[%s2 + $0x30] sm:$0xff]
    %v210 = vld [vmem:[%s2 + $0x38] sm:$0xff]
    %v211 = vld [vmem:[%s2 + $0x40] sm:$0xff]
    %v212 = vld [vmem:[%s2 + $0x48] sm:$0xff]
    %v213 = vld [vmem:[%s2 + $0x50] sm:$0xff]
    %v214 = vld [vmem:[%s2 + $0x58] sm:$0xff]
    %v215 = vld [vmem:[%s2 + $0x60] sm:$0xff]
    %v216 = vld [vmem:[%s2 + $0x68] sm:$0xff]
    %v217 = vld [vmem:[%s2 + $0x70] sm:$0xff]
    %v218 = vld [vmem:[%s2 + $0x78] sm:$0xff]
    %v219 = vld [vmem:[#allocation2] sm:$0xff]
    %v220 = vld [vmem:[#allocation2 + $0x8] sm:$0xff]
    %v221 = vld [vmem:[#allocation2 + $0x10] sm:$0xff]
    %v222 = vld [vmem:[#allocation2 + $0x18] sm:$0xff]
    %v223 = vld [vmem:[#allocation2 + $0x20] sm:$0xff]
    %v224 = vld [vmem:[#allocation2 + $0x28] sm:$0xff]
    %v225 = vld [vmem:[#allocation2 + $0x30] sm:$0xff]
    %v226 = vld [vmem:[#allocation2 + $0x38] sm:$0xff]
    %v227 = vld [vmem:[#allocation2 + $0x40] sm:$0xff]
    %v228 = vld [vmem:[#allocation2 + $0x48] sm:$0xff]
    %v229 = vld [vmem:[#allocation2 + $0x50] sm:$0xff]
    %v230 = vld [vmem:[#allocation2 + $0x58] sm:$0xff]
    %v231 = vld [vmem:[#allocation2 + $0x60] sm:$0xff]
    %v232 = vld [vmem:[#allocation2 + $0x68] sm:$0xff]
    %v233 = vld [vmem:[#allocation2 + $0x70] sm:$0xff]
    %v234 = vld [vmem:[#allocation2 + $0x78] sm:$0xff]
    %236 = vset.pattern.permute.xlu0 0
    %237 = vperm.xlu0 %236, %v203
    %v238 = vpop.permute.xlu0 %237
    %241 = vset.pattern.permute.xlu0 0
    %242 = vperm.xlu0 %241, %v204
    %v243 = vpop.permute.xlu0 %242
    %246 = vset.pattern.permute.xlu0 0
    %247 = vperm.xlu0 %246, %v205
    %v248 = vpop.permute.xlu0 %247
    %251 = vset.pattern.permute.xlu0 0
    %252 = vperm.xlu0 %251, %v206
    %v253 = vpop.permute.xlu0 %252
    %256 = vset.pattern.permute.xlu0 0
    %257 = vperm.xlu0 %256, %v207
    %v258 = vpop.permute.xlu0 %257
    %261 = vset.pattern.permute.xlu0 0
    %262 = vperm.xlu0 %261, %v208
    %v263 = vpop.permute.xlu0 %262
    %266 = vset.pattern.permute.xlu0 0
    %267 = vperm.xlu0 %266, %v209
    %v268 = vpop.permute.xlu0 %267
    %271 = vset.pattern.permute.xlu0 0
    %272 = vperm.xlu0 %271, %v210
    %v273 = vpop.permute.xlu0 %272
    %276 = vset.pattern.permute.xlu0 0
    %277 = vperm.xlu0 %276, %v211
    %v278 = vpop.permute.xlu0 %277
    %281 = vset.pattern.permute.xlu0 0
    %282 = vperm.xlu0 %281, %v212
    %v283 = vpop.permute.xlu0 %282
    %286 = vset.pattern.permute.xlu0 0
    %287 = vperm.xlu0 %286, %v213
    %v288 = vpop.permute.xlu0 %287
    %291 = vset.pattern.permute.xlu0 0
    %292 = vperm.xlu0 %291, %v214
    %v293 = vpop.permute.xlu0 %292
    %296 = vset.pattern.permute.xlu0 0
    %297 = vperm.xlu0 %296, %v215
    %v298 = vpop.permute.xlu0 %297
    %301 = vset.pattern.permute.xlu0 0
    %302 = vperm.xlu0 %301, %v216
    %v303 = vpop.permute.xlu0 %302
    %306 = vset.pattern.permute.xlu0 0
    %307 = vperm.xlu0 %306, %v217
    %v308 = vpop.permute.xlu0 %307
    %311 = vset.pattern.permute.xlu0 0
    %312 = vperm.xlu0 %311, %v218
    %v313 = vpop.permute.xlu0 %312
    %v315 = vmul.f32 %v238, %v219
    %v316 = vmul.f32 %v243, %v220
    %v317 = vmul.f32 %v248, %v221
    %v318 = vmul.f32 %v253, %v222
    %v319 = vmul.f32 %v258, %v223
    %v320 = vmul.f32 %v263, %v224
    %v321 = vmul.f32 %v268, %v225
    %v322 = vmul.f32 %v273, %v226
    %v323 = vmul.f32 %v278, %v227
    %v324 = vmul.f32 %v283, %v228
    %v325 = vmul.f32 %v288, %v229
    %v326 = vmul.f32 %v293, %v230
    %v327 = vmul.f32 %v298, %v231
    %v328 = vmul.f32 %v303, %v232
    %v329 = vmul.f32 %v308, %v233
    %v330 = vmul.f32 %v313, %v234
    %v331 = vld [vmem:[%s3] sm:$0x1]
    %v333 = vperm.slane %v331, 0
    %v335 = vadd.f32 %v315, %v333
    %v336 = vadd.f32 %v316, %v333
    %v337 = vadd.f32 %v317, %v333
    %v338 = vadd.f32 %v318, %v333
    %v339 = vadd.f32 %v319, %v333
    %v340 = vadd.f32 %v320, %v333
    %v341 = vadd.f32 %v321, %v333
    %v342 = vadd.f32 %v322, %v333
    %v343 = vadd.f32 %v323, %v333
    %v344 = vadd.f32 %v324, %v333
    %v345 = vadd.f32 %v325, %v333
    %v346 = vadd.f32 %v326, %v333
    %v347 = vadd.f32 %v327, %v333
    %v348 = vadd.f32 %v328, %v333
    %v349 = vadd.f32 %v329, %v333
    %v350 = vadd.f32 %v330, %v333
    %vm351 = vcmp.ge.f32.partialorder %v335, 0.0
    %vm352 = vcmp.ge.f32.partialorder %v336, 0.0
    %vm353 = vcmp.ge.f32.partialorder %v337, 0.0
    %vm354 = vcmp.ge.f32.partialorder %v338, 0.0
    %vm355 = vcmp.ge.f32.partialorder %v339, 0.0
    %vm356 = vcmp.ge.f32.partialorder %v340, 0.0
    %vm357 = vcmp.ge.f32.partialorder %v341, 0.0
    %vm358 = vcmp.ge.f32.partialorder %v342, 0.0
    %vm359 = vcmp.ge.f32.partialorder %v343, 0.0
    %vm360 = vcmp.ge.f32.partialorder %v344, 0.0
    %vm361 = vcmp.ge.f32.partialorder %v345, 0.0
    %vm362 = vcmp.ge.f32.partialorder %v346, 0.0
    %vm363 = vcmp.ge.f32.partialorder %v347, 0.0
    %vm364 = vcmp.ge.f32.partialorder %v348, 0.0
    %vm365 = vcmp.ge.f32.partialorder %v349, 0.0
    %vm366 = vcmp.ge.f32.partialorder %v350, 0.0
    %v367 = vmul.f32 %v335, 0.01
    %v368 = vmul.f32 %v336, 0.01
    %v369 = vmul.f32 %v337, 0.01
    %v370 = vmul.f32 %v338, 0.01
    %v371 = vmul.f32 %v339, 0.01
    %v372 = vmul.f32 %v340, 0.01
    %v373 = vmul.f32 %v341, 0.01
    %v374 = vmul.f32 %v342, 0.01
    %v375 = vmul.f32 %v343, 0.01
    %v376 = vmul.f32 %v344, 0.01
    %v377 = vmul.f32 %v345, 0.01
    %v378 = vmul.f32 %v346, 0.01
    %v379 = vmul.f32 %v347, 0.01
    %v380 = vmul.f32 %v348, 0.01
    %v381 = vmul.f32 %v349, 0.01
    %v382 = vmul.f32 %v350, 0.01
    %v383 = vsel %vm351, %v335, %v367
    %v384 = vsel %vm352, %v336, %v368
    %v385 = vsel %vm353, %v337, %v369
    %v386 = vsel %vm354, %v338, %v370
    %v387 = vsel %vm355, %v339, %v371
    %v388 = vsel %vm356, %v340, %v372
    %v389 = vsel %vm357, %v341, %v373
    %v390 = vsel %vm358, %v342, %v374
    %v391 = vsel %vm359, %v343, %v375
    %v392 = vsel %vm360, %v344, %v376
    %v393 = vsel %vm361, %v345, %v377
    %v394 = vsel %vm362, %v346, %v378
    %v395 = vsel %vm363, %v347, %v379
    %v396 = vsel %vm364, %v348, %v380
    %v397 = vsel %vm365, %v349, %v381
    %v398 = vsel %vm366, %v350, %v382
    %399 = vst [vmem:[%s4] sm:$0xff] %v383
    %400 = vst [vmem:[%s4 + $0x8] sm:$0xff] %v384
    %401 = vst [vmem:[%s4 + $0x10] sm:$0xff] %v385
    %402 = vst [vmem:[%s4 + $0x18] sm:$0xff] %v386
    %403 = vst [vmem:[%s4 + $0x20] sm:$0xff] %v387
    %404 = vst [vmem:[%s4 + $0x28] sm:$0xff] %v388
    %405 = vst [vmem:[%s4 + $0x30] sm:$0xff] %v389
    %406 = vst [vmem:[%s4 + $0x38] sm:$0xff] %v390
    %407 = vst [vmem:[%s4 + $0x40] sm:$0xff] %v391
    %408 = vst [vmem:[%s4 + $0x48] sm:$0xff] %v392
    %409 = vst [vmem:[%s4 + $0x50] sm:$0xff] %v393
    %410 = vst [vmem:[%s4 + $0x58] sm:$0xff] %v394
    %411 = vst [vmem:[%s4 + $0x60] sm:$0xff] %v395
    %412 = vst [vmem:[%s4 + $0x68] sm:$0xff] %v396
    %413 = vst [vmem:[%s4 + $0x70] sm:$0xff] %v397
    %414 = vst [vmem:[%s4 + $0x78] sm:$0xff] %v398
  $region25: #{gcn_layer_pallas.5} parent=0 // pred_fallthru
    _
  // Predicated region
  $region26: #{gcn_layer_pallas.5} parent=0 // pred_check
    _
  $region27: #{gcn_layer_pallas.5} parent=0 // pred_check_branch
    %416 = sbr.rel (0) target = $region29
  $region28: #{gcn_layer_pallas.5} parent=0 // pred_region
    _
  $region29: #{gcn_layer_pallas.5} parent=0 // pred_fallthru
    _
  // Predicated region
  $region30: #{gcn_layer_pallas.5} parent=0 // pred_check
    _
  $region31: #{gcn_layer_pallas.5} parent=0 // pred_check_branch
    %418 = sbr.rel (0) target = $region33
  $region32: #{gcn_layer_pallas.5} parent=0 // pred_region
    _
  $region33: #{gcn_layer_pallas.5} parent=0 // pred_fallthru
    _

// kernel: gcn_layer_pallas.7
$region0: #{gcn_layer_pallas.7}
  #allocation0 [shape = 'u32[]', space=smem, size = 0x4, offset = 0x4, fixed_abs, tag = 'smem constant byte address 0x4 - core index']
  #allocation1 [shape = 'u32[72,128]{1,0:T(1,128)}', space=vmem, size = 0x9000, scoped, tag = 'internal scratch']
  #allocation2 [shape = 'f32[128,128]{1,0:T(8,128)}', space=vmem, size = 0x10000, scoped, tag = 'scratch operand']
  %s0 = inlined_call_operand.vmem [shape: bf16[128,128], index: 0, kind: input, shape index: {}]
  %s1 = inlined_call_operand.vmem [shape: f32[128,128], index: 1, kind: input, shape index: {}]
  %s2 = inlined_call_operand.vmem [shape: f32[128,1], index: 2, kind: input, shape index: {}]
  %s3 = inlined_call_operand.vmem [shape: f32[1,128], index: 3, kind: input, shape index: {}]
  %s4 = inlined_call_operand.vmem [shape: f32[128,128], index: 4, kind: output, shape index: {}]
  %s5 = sld [smem:[#allocation0]]
  $region34: #{gcn_layer_pallas.7} parent=0
    _
  %s7 = ssub.s32 1, %s5
  %s8 = scalar_select 0, %s7, %s5
  // Predicated region
  $region2: #{gcn_layer_pallas.7} parent=0 // pred_check
    _
  $region3: #{gcn_layer_pallas.7} parent=0 // pred_check_branch
    %10 = sbr.rel (0) target = $region5
  $region4: #{gcn_layer_pallas.7} parent=0 // pred_region
    _
  $region5: #{gcn_layer_pallas.7} parent=0 // pred_fallthru
    _
  // Predicated region
  $region6: #{gcn_layer_pallas.7} parent=0 // pred_check
    _
  $region7: #{gcn_layer_pallas.7} parent=0 // pred_check_branch
    %12 = sbr.rel (0) target = $region9
  $region8: #{gcn_layer_pallas.7} parent=0 // pred_region
    _
  $region9: #{gcn_layer_pallas.7} parent=0 // pred_fallthru
    _
  // Predicated region
  $region10: #{gcn_layer_pallas.7} parent=0 // pred_check
    _
  $region11: #{gcn_layer_pallas.7} parent=0 // pred_check_branch
    %14 = sbr.rel (0) target = $region13
  $region12: #{gcn_layer_pallas.7} parent=0 // pred_region
    _
  $region13: #{gcn_layer_pallas.7} parent=0 // pred_fallthru
    _
  // Predicated region
  $region14: #{gcn_layer_pallas.7} parent=0 // pred_check
    _
  $region15: #{gcn_layer_pallas.7} parent=0 // pred_check_branch
    %16 = sbr.rel (0) target = $region17
  $region16: #{gcn_layer_pallas.7} parent=0 // pred_region
    _
  $region17: #{gcn_layer_pallas.7} parent=0 // pred_fallthru
    _
  %p17 = scmp.eq.s32.totalorder 0, 0
  // Predicated region
  $region18: #{gcn_layer_pallas.7} parent=0 // pred_check
    %p18 = pneg %p17
  $region19: #{gcn_layer_pallas.7} parent=0 // pred_check_branch
    %20 = sbr.rel (%p18) target = $region21
  $region20: #{gcn_layer_pallas.7} parent=0 // pred_region
    %21 = vst [vmem:[#allocation2] sm:$0xff] 0.0
    %22 = vst [vmem:[#allocation2 + $0x8] sm:$0xff] 0.0
    %23 = vst [vmem:[#allocation2 + $0x10] sm:$0xff] 0.0
    %24 = vst [vmem:[#allocation2 + $0x18] sm:$0xff] 0.0
    %25 = vst [vmem:[#allocation2 + $0x20] sm:$0xff] 0.0
    %26 = vst [vmem:[#allocation2 + $0x28] sm:$0xff] 0.0
    %27 = vst [vmem:[#allocation2 + $0x30] sm:$0xff] 0.0
    %28 = vst [vmem:[#allocation2 + $0x38] sm:$0xff] 0.0
    %29 = vst [vmem:[#allocation2 + $0x40] sm:$0xff] 0.0
    %30 = vst [vmem:[#allocation2 + $0x48] sm:$0xff] 0.0
    %31 = vst [vmem:[#allocation2 + $0x50] sm:$0xff] 0.0
    %32 = vst [vmem:[#allocation2 + $0x58] sm:$0xff] 0.0
    %33 = vst [vmem:[#allocation2 + $0x60] sm:$0xff] 0.0
    %34 = vst [vmem:[#allocation2 + $0x68] sm:$0xff] 0.0
    %35 = vst [vmem:[#allocation2 + $0x70] sm:$0xff] 0.0
    %36 = vst [vmem:[#allocation2 + $0x78] sm:$0xff] 0.0
  $region21: #{gcn_layer_pallas.7} parent=0 // pred_fallthru
    _
  %s37 = smul.u32 0, 128
  %s38 = scalar_lea.vmem %s1, %s37
  %v39 = vld [vmem:[%s38] sm:$0xff]
  %v40 = vld [vmem:[%s38 + $0x8] sm:$0xff]
  %v41 = vld [vmem:[%s38 + $0x10] sm:$0xff]
  %v42 = vld [vmem:[%s38 + $0x18] sm:$0xff]
  %v43 = vld [vmem:[%s38 + $0x20] sm:$0xff]
  %v44 = vld [vmem:[%s38 + $0x28] sm:$0xff]
  %v45 = vld [vmem:[%s38 + $0x30] sm:$0xff]
  %v46 = vld [vmem:[%s38 + $0x38] sm:$0xff]
  %v47 = vld [vmem:[%s38 + $0x40] sm:$0xff]
  %v48 = vld [vmem:[%s38 + $0x48] sm:$0xff]
  %v49 = vld [vmem:[%s38 + $0x50] sm:$0xff]
  %v50 = vld [vmem:[%s38 + $0x58] sm:$0xff]
  %v51 = vld [vmem:[%s38 + $0x60] sm:$0xff]
  %v52 = vld [vmem:[%s38 + $0x68] sm:$0xff]
  %v53 = vld [vmem:[%s38 + $0x70] sm:$0xff]
  %v54 = vld [vmem:[%s38 + $0x78] sm:$0xff]
  %v55 = vld [vmem:[%s0] sm:$0xf]
  %v56 = vld [vmem:[%s0 + $0x4] sm:$0xf]
  %v57 = vld [vmem:[%s0 + $0x8] sm:$0xf]
  %v58 = vld [vmem:[%s0 + $0xc] sm:$0xf]
  %v59 = vld [vmem:[%s0 + $0x10] sm:$0xf]
  %v60 = vld [vmem:[%s0 + $0x14] sm:$0xf]
  %v61 = vld [vmem:[%s0 + $0x18] sm:$0xf]
  %v62 = vld [vmem:[%s0 + $0x1c] sm:$0xf]
  %v63 = vld [vmem:[%s0 + $0x20] sm:$0xf]
  %v64 = vld [vmem:[%s0 + $0x24] sm:$0xf]
  %v65 = vld [vmem:[%s0 + $0x28] sm:$0xf]
  %v66 = vld [vmem:[%s0 + $0x2c] sm:$0xf]
  %v67 = vld [vmem:[%s0 + $0x30] sm:$0xf]
  %v68 = vld [vmem:[%s0 + $0x34] sm:$0xf]
  %v69 = vld [vmem:[%s0 + $0x38] sm:$0xf]
  %v70 = vld [vmem:[%s0 + $0x3c] sm:$0xf]
  %v71 = vunpack.c.l.bf16 %v55
  %v72 = vunpack.c.l.bf16 %v56
  %v73 = vunpack.c.l.bf16 %v57
  %v74 = vunpack.c.l.bf16 %v58
  %v75 = vunpack.c.l.bf16 %v59
  %v76 = vunpack.c.l.bf16 %v60
  %v77 = vunpack.c.l.bf16 %v61
  %v78 = vunpack.c.l.bf16 %v62
  %v79 = vunpack.c.l.bf16 %v63
  %v80 = vunpack.c.l.bf16 %v64
  %v81 = vunpack.c.l.bf16 %v65
  %v82 = vunpack.c.l.bf16 %v66
  %v83 = vunpack.c.l.bf16 %v67
  %v84 = vunpack.c.l.bf16 %v68
  %v85 = vunpack.c.l.bf16 %v69
  %v86 = vunpack.c.l.bf16 %v70
  %v87 = vld [vmem:[#allocation2] sm:$0xff]
  %v88 = vld [vmem:[#allocation2 + $0x8] sm:$0xff]
  %v89 = vld [vmem:[#allocation2 + $0x10] sm:$0xff]
  %v90 = vld [vmem:[#allocation2 + $0x18] sm:$0xff]
  %v91 = vld [vmem:[#allocation2 + $0x20] sm:$0xff]
  %v92 = vld [vmem:[#allocation2 + $0x28] sm:$0xff]
  %v93 = vld [vmem:[#allocation2 + $0x30] sm:$0xff]
  %v94 = vld [vmem:[#allocation2 + $0x38] sm:$0xff]
  %v95 = vld [vmem:[#allocation2 + $0x40] sm:$0xff]
  %v96 = vld [vmem:[#allocation2 + $0x48] sm:$0xff]
  %v97 = vld [vmem:[#allocation2 + $0x50] sm:$0xff]
  %v98 = vld [vmem:[#allocation2 + $0x58] sm:$0xff]
  %v99 = vld [vmem:[#allocation2 + $0x60] sm:$0xff]
  %v100 = vld [vmem:[#allocation2 + $0x68] sm:$0xff]
  %v101 = vld [vmem:[#allocation2 + $0x70] sm:$0xff]
  %v102 = vld [vmem:[#allocation2 + $0x78] sm:$0xff]
  %103 = vmatpush.msra.mxu0 %v54
  %104 = vmatpush.msra.mxu0 %v53
  %105 = vmatpush.msra.mxu0 %v52
  %106 = vmatpush.msra.mxu0 %v51
  %107 = vmatpush.msra.mxu0 %v50
  %108 = vmatpush.msra.mxu0 %v49
  %109 = vmatpush.msra.mxu0 %v48
  %110 = vmatpush.msra.mxu0 %v47
  %111 = vmatpush.msra.mxu0 %v46
  %112 = vmatpush.msra.mxu0 %v45
  %113 = vmatpush.msra.mxu0 %v44
  %114 = vmatpush.msra.mxu0 %v43
  %115 = vmatpush.msra.mxu0 %v42
  %116 = vmatpush.msra.mxu0 %v41
  %117 = vmatpush.msra.mxu0 %v40
  %118 = vmatpush.msra.mxu0 %v39
  %119 = vmatmul.f32.gmra.mxu0 %v71
  %v120 = vpop.f32.mrf.mxu0
  %v121 = vadd.f32 0.0, %v120
  %122 = vmatmul.f32.gmra.mxu0 %v72
  %v123 = vpop.f32.mrf.mxu0
  %v124 = vadd.f32 0.0, %v123
  %125 = vmatmul.f32.gmra.mxu0 %v73
  %v126 = vpop.f32.mrf.mxu0
  %v127 = vadd.f32 0.0, %v126
  %128 = vmatmul.f32.gmra.mxu0 %v74
  %v129 = vpop.f32.mrf.mxu0
  %v130 = vadd.f32 0.0, %v129
  %131 = vmatmul.f32.gmra.mxu0 %v75
  %v132 = vpop.f32.mrf.mxu0
  %v133 = vadd.f32 0.0, %v132
  %134 = vmatmul.f32.gmra.mxu0 %v76
  %v135 = vpop.f32.mrf.mxu0
  %v136 = vadd.f32 0.0, %v135
  %137 = vmatmul.f32.gmra.mxu0 %v77
  %v138 = vpop.f32.mrf.mxu0
  %v139 = vadd.f32 0.0, %v138
  %140 = vmatmul.f32.gmra.mxu0 %v78
  %v141 = vpop.f32.mrf.mxu0
  %v142 = vadd.f32 0.0, %v141
  %143 = vmatmul.f32.gmra.mxu0 %v79
  %v144 = vpop.f32.mrf.mxu0
  %v145 = vadd.f32 0.0, %v144
  %146 = vmatmul.f32.gmra.mxu0 %v80
  %v147 = vpop.f32.mrf.mxu0
  %v148 = vadd.f32 0.0, %v147
  %149 = vmatmul.f32.gmra.mxu0 %v81
  %v150 = vpop.f32.mrf.mxu0
  %v151 = vadd.f32 0.0, %v150
  %152 = vmatmul.f32.gmra.mxu0 %v82
  %v153 = vpop.f32.mrf.mxu0
  %v154 = vadd.f32 0.0, %v153
  %155 = vmatmul.f32.gmra.mxu0 %v83
  %v156 = vpop.f32.mrf.mxu0
  %v157 = vadd.f32 0.0, %v156
  %158 = vmatmul.f32.gmra.mxu0 %v84
  %v159 = vpop.f32.mrf.mxu0
  %v160 = vadd.f32 0.0, %v159
  %161 = vmatmul.f32.gmra.mxu0 %v85
  %v162 = vpop.f32.mrf.mxu0
  %v163 = vadd.f32 0.0, %v162
  %164 = vmatmul.f32.gmra.mxu0 %v86
  %v165 = vpop.f32.mrf.mxu0
  %v166 = vadd.f32 0.0, %v165
  %167 = vdwg.mxu0
  %v168 = vadd.f32 %v87, %v121
  %v169 = vadd.f32 %v88, %v124
  %v170 = vadd.f32 %v89, %v127
  %v171 = vadd.f32 %v90, %v130
  %v172 = vadd.f32 %v91, %v133
  %v173 = vadd.f32 %v92, %v136
  %v174 = vadd.f32 %v93, %v139
  %v175 = vadd.f32 %v94, %v142
  %v176 = vadd.f32 %v95, %v145
  %v177 = vadd.f32 %v96, %v148
  %v178 = vadd.f32 %v97, %v151
  %v179 = vadd.f32 %v98, %v154
  %v180 = vadd.f32 %v99, %v157
  %v181 = vadd.f32 %v100, %v160
  %v182 = vadd.f32 %v101, %v163
  %v183 = vadd.f32 %v102, %v166
  %184 = vst [vmem:[#allocation2] sm:$0xff] %v168
  %185 = vst [vmem:[#allocation2 + $0x8] sm:$0xff] %v169
  %186 = vst [vmem:[#allocation2 + $0x10] sm:$0xff] %v170
  %187 = vst [vmem:[#allocation2 + $0x18] sm:$0xff] %v171
  %188 = vst [vmem:[#allocation2 + $0x20] sm:$0xff] %v172
  %189 = vst [vmem:[#allocation2 + $0x28] sm:$0xff] %v173
  %190 = vst [vmem:[#allocation2 + $0x30] sm:$0xff] %v174
  %191 = vst [vmem:[#allocation2 + $0x38] sm:$0xff] %v175
  %192 = vst [vmem:[#allocation2 + $0x40] sm:$0xff] %v176
  %193 = vst [vmem:[#allocation2 + $0x48] sm:$0xff] %v177
  %194 = vst [vmem:[#allocation2 + $0x50] sm:$0xff] %v178
  %195 = vst [vmem:[#allocation2 + $0x58] sm:$0xff] %v179
  %196 = vst [vmem:[#allocation2 + $0x60] sm:$0xff] %v180
  %197 = vst [vmem:[#allocation2 + $0x68] sm:$0xff] %v181
  %198 = vst [vmem:[#allocation2 + $0x70] sm:$0xff] %v182
  %199 = vst [vmem:[#allocation2 + $0x78] sm:$0xff] %v183
  // Predicated region
  $region22: #{gcn_layer_pallas.7} parent=0 // pred_check
    %p200 = pneg %p17
  $region23: #{gcn_layer_pallas.7} parent=0 // pred_check_branch
    %202 = sbr.rel (%p200) target = $region25
  $region24: #{gcn_layer_pallas.7} parent=0 // pred_region
    %v203 = vld [vmem:[%s2] sm:$0xff]
    %v204 = vld [vmem:[%s2 + $0x8] sm:$0xff]
    %v205 = vld [vmem:[%s2 + $0x10] sm:$0xff]
    %v206 = vld [vmem:[%s2 + $0x18] sm:$0xff]
    %v207 = vld [vmem:[%s2 + $0x20] sm:$0xff]
    %v208 = vld [vmem:[%s2 + $0x28] sm:$0xff]
    %v209 = vld [vmem:[%s2 + $0x30] sm:$0xff]
    %v210 = vld [vmem:[%s2 + $0x38] sm:$0xff]
    %v211 = vld [vmem:[%s2 + $0x40] sm:$0xff]
    %v212 = vld [vmem:[%s2 + $0x48] sm:$0xff]
    %v213 = vld [vmem:[%s2 + $0x50] sm:$0xff]
    %v214 = vld [vmem:[%s2 + $0x58] sm:$0xff]
    %v215 = vld [vmem:[%s2 + $0x60] sm:$0xff]
    %v216 = vld [vmem:[%s2 + $0x68] sm:$0xff]
    %v217 = vld [vmem:[%s2 + $0x70] sm:$0xff]
    %v218 = vld [vmem:[%s2 + $0x78] sm:$0xff]
    %v219 = vld [vmem:[#allocation2] sm:$0xff]
    %v220 = vld [vmem:[#allocation2 + $0x8] sm:$0xff]
    %v221 = vld [vmem:[#allocation2 + $0x10] sm:$0xff]
    %v222 = vld [vmem:[#allocation2 + $0x18] sm:$0xff]
    %v223 = vld [vmem:[#allocation2 + $0x20] sm:$0xff]
    %v224 = vld [vmem:[#allocation2 + $0x28] sm:$0xff]
    %v225 = vld [vmem:[#allocation2 + $0x30] sm:$0xff]
    %v226 = vld [vmem:[#allocation2 + $0x38] sm:$0xff]
    %v227 = vld [vmem:[#allocation2 + $0x40] sm:$0xff]
    %v228 = vld [vmem:[#allocation2 + $0x48] sm:$0xff]
    %v229 = vld [vmem:[#allocation2 + $0x50] sm:$0xff]
    %v230 = vld [vmem:[#allocation2 + $0x58] sm:$0xff]
    %v231 = vld [vmem:[#allocation2 + $0x60] sm:$0xff]
    %v232 = vld [vmem:[#allocation2 + $0x68] sm:$0xff]
    %v233 = vld [vmem:[#allocation2 + $0x70] sm:$0xff]
    %v234 = vld [vmem:[#allocation2 + $0x78] sm:$0xff]
    %236 = vset.pattern.permute.xlu0 0
    %237 = vperm.xlu0 %236, %v203
    %v238 = vpop.permute.xlu0 %237
    %241 = vset.pattern.permute.xlu0 0
    %242 = vperm.xlu0 %241, %v204
    %v243 = vpop.permute.xlu0 %242
    %246 = vset.pattern.permute.xlu0 0
    %247 = vperm.xlu0 %246, %v205
    %v248 = vpop.permute.xlu0 %247
    %251 = vset.pattern.permute.xlu0 0
    %252 = vperm.xlu0 %251, %v206
    %v253 = vpop.permute.xlu0 %252
    %256 = vset.pattern.permute.xlu0 0
    %257 = vperm.xlu0 %256, %v207
    %v258 = vpop.permute.xlu0 %257
    %261 = vset.pattern.permute.xlu0 0
    %262 = vperm.xlu0 %261, %v208
    %v263 = vpop.permute.xlu0 %262
    %266 = vset.pattern.permute.xlu0 0
    %267 = vperm.xlu0 %266, %v209
    %v268 = vpop.permute.xlu0 %267
    %271 = vset.pattern.permute.xlu0 0
    %272 = vperm.xlu0 %271, %v210
    %v273 = vpop.permute.xlu0 %272
    %276 = vset.pattern.permute.xlu0 0
    %277 = vperm.xlu0 %276, %v211
    %v278 = vpop.permute.xlu0 %277
    %281 = vset.pattern.permute.xlu0 0
    %282 = vperm.xlu0 %281, %v212
    %v283 = vpop.permute.xlu0 %282
    %286 = vset.pattern.permute.xlu0 0
    %287 = vperm.xlu0 %286, %v213
    %v288 = vpop.permute.xlu0 %287
    %291 = vset.pattern.permute.xlu0 0
    %292 = vperm.xlu0 %291, %v214
    %v293 = vpop.permute.xlu0 %292
    %296 = vset.pattern.permute.xlu0 0
    %297 = vperm.xlu0 %296, %v215
    %v298 = vpop.permute.xlu0 %297
    %301 = vset.pattern.permute.xlu0 0
    %302 = vperm.xlu0 %301, %v216
    %v303 = vpop.permute.xlu0 %302
    %306 = vset.pattern.permute.xlu0 0
    %307 = vperm.xlu0 %306, %v217
    %v308 = vpop.permute.xlu0 %307
    %311 = vset.pattern.permute.xlu0 0
    %312 = vperm.xlu0 %311, %v218
    %v313 = vpop.permute.xlu0 %312
    %v315 = vmul.f32 %v238, %v219
    %v316 = vmul.f32 %v243, %v220
    %v317 = vmul.f32 %v248, %v221
    %v318 = vmul.f32 %v253, %v222
    %v319 = vmul.f32 %v258, %v223
    %v320 = vmul.f32 %v263, %v224
    %v321 = vmul.f32 %v268, %v225
    %v322 = vmul.f32 %v273, %v226
    %v323 = vmul.f32 %v278, %v227
    %v324 = vmul.f32 %v283, %v228
    %v325 = vmul.f32 %v288, %v229
    %v326 = vmul.f32 %v293, %v230
    %v327 = vmul.f32 %v298, %v231
    %v328 = vmul.f32 %v303, %v232
    %v329 = vmul.f32 %v308, %v233
    %v330 = vmul.f32 %v313, %v234
    %v331 = vld [vmem:[%s3] sm:$0x1]
    %v333 = vperm.slane %v331, 0
    %v335 = vadd.f32 %v315, %v333
    %v336 = vadd.f32 %v316, %v333
    %v337 = vadd.f32 %v317, %v333
    %v338 = vadd.f32 %v318, %v333
    %v339 = vadd.f32 %v319, %v333
    %v340 = vadd.f32 %v320, %v333
    %v341 = vadd.f32 %v321, %v333
    %v342 = vadd.f32 %v322, %v333
    %v343 = vadd.f32 %v323, %v333
    %v344 = vadd.f32 %v324, %v333
    %v345 = vadd.f32 %v325, %v333
    %v346 = vadd.f32 %v326, %v333
    %v347 = vadd.f32 %v327, %v333
    %v348 = vadd.f32 %v328, %v333
    %v349 = vadd.f32 %v329, %v333
    %v350 = vadd.f32 %v330, %v333
    %351 = vst [vmem:[%s4] sm:$0xff] %v335
    %352 = vst [vmem:[%s4 + $0x8] sm:$0xff] %v336
    %353 = vst [vmem:[%s4 + $0x10] sm:$0xff] %v337
    %354 = vst [vmem:[%s4 + $0x18] sm:$0xff] %v338
    %355 = vst [vmem:[%s4 + $0x20] sm:$0xff] %v339
    %356 = vst [vmem:[%s4 + $0x28] sm:$0xff] %v340
    %357 = vst [vmem:[%s4 + $0x30] sm:$0xff] %v341
    %358 = vst [vmem:[%s4 + $0x38] sm:$0xff] %v342
    %359 = vst [vmem:[%s4 + $0x40] sm:$0xff] %v343
    %360 = vst [vmem:[%s4 + $0x48] sm:$0xff] %v344
    %361 = vst [vmem:[%s4 + $0x50] sm:$0xff] %v345
    %362 = vst [vmem:[%s4 + $0x58] sm:$0xff] %v346
    %363 = vst [vmem:[%s4 + $0x60] sm:$0xff] %v347
    %364 = vst [vmem:[%s4 + $0x68] sm:$0xff] %v348
    %365 = vst [vmem:[%s4 + $0x70] sm:$0xff] %v349
    %366 = vst [vmem:[%s4 + $0x78] sm:$0xff] %v350
  $region25: #{gcn_layer_pallas.7} parent=0 // pred_fallthru
    _
  // Predicated region
  $region26: #{gcn_layer_pallas.7} parent=0 // pred_check
    _
  $region27: #{gcn_layer_pallas.7} parent=0 // pred_check_branch
    %368 = sbr.rel (0) target = $region29
  $region28: #{gcn_layer_pallas.7} parent=0 // pred_region
    _
  $region29: #{gcn_layer_pallas.7} parent=0 // pred_fallthru
    _
  // Predicated region
  $region30: #{gcn_layer_pallas.7} parent=0 // pred_check
    _
  $region31: #{gcn_layer_pallas.7} parent=0 // pred_check_branch
    %370 = sbr.rel (0) target = $region33
  $region32: #{gcn_layer_pallas.7} parent=0 // pred_region
    _
  $region33: #{gcn_layer_pallas.7} parent=0 // pred_fallthru
    _

</llo_original>
